<compile_context>
chip_gen: v7x
topology: tpu7x:2x2x1
jax: 0.10.0
libtpu: 0.0.40
codegen_flags: <defaults>
</compile_context>

<pallas_src>
import jax
import jax.numpy as jnp
from jax import lax
from jax.experimental import pallas as pl
from jax.experimental.pallas import tpu as pltpu

EPS = 1e-5


# ----------------------------------------------------------------------------
# Fused Pallas kernel (one batch image per grid step, (C, H*W) layout)
# ----------------------------------------------------------------------------
def _make_fused_kernel(*, chid, h, w, stride, expand, identity):
  hw = h * w

  def kernel(*refs):
    it = iter(refs)
    x_ref = next(it)                       # (Cin, HW)
    if expand:
      w1_ref = next(it)                    # (Chid, Cin)
      b1_ref = next(it)                    # (Chid, 1)
    wm_ref = next(it)                      # (9, Chid, HW) weight*halo-mask
    b2_ref = next(it)                      # (Chid, 1)
    if stride != 1:
      s_ref = next(it)                     # (HW, Ho*Wo) 0/1 selection
    w2_ref = next(it)                      # (Cout, Chid)
    b3_ref = next(it)                      # (Cout, 1)
    o_ref = next(it)                       # (Cout, Ho*Wo)

    x = x_ref[...]                         # loaded once, reused for residual

    # ---- stage 1: expand 1x1 conv + folded BN + ReLU6 (MXU) ---------------
    if expand:
      hid = jnp.dot(w1_ref[...], x, preferred_element_type=jnp.float32)
      hid = jnp.clip(hid + b1_ref[...], 0.0, 6.0)        # (Chid, HW)
    else:
      hid = x                                            # Chid == Cin

    # ---- stage 2: depthwise 3x3 via 9 lane-rolls + masked FMAs ------------
    # out[c, i*W+j] = sum_{di,dj} wdw[c,di,dj] * hid[c, (i+di-1)*W + (j+dj-1)]
    # with zero padding folded into wm (weight * validity mask).
    acc = wm_ref[4] * hid                                # center tap (1,1)
    for di in range(3):
      for dj in range(3):
        tap = di * 3 + dj
        if tap == 4:
          continue
        off = (di - 1) * w + (dj - 1)
        shifted = pltpu.roll(hid, shift=(-off) % hw, axis=1)
        acc = acc + wm_ref[tap] * shifted                # (Chid, HW)

    # ---- stride-2 subsample (MXU selection matmul), then BN + ReLU6 -------
    if stride != 1:
      acc = jnp.dot(acc, s_ref[...], preferred_element_type=jnp.float32)
    d = jnp.clip(acc + b2_ref[...], 0.0, 6.0)            # (Chid, Ho*Wo)

    # ---- stage 3: project 1x1 conv + folded BN (+ residual) ---------------
    y = jnp.dot(w2_ref[...], d, preferred_element_type=jnp.float32)
    y = y + b3_ref[...]
    if identity:
      y = y + x                                          # stride==1, Cin==Cout
    o_ref[...] = y

  return kernel


# ----------------------------------------------------------------------------
# Host-side parameter folding / table construction (plain JAX, runs once)
# ----------------------------------------------------------------------------
def fold_params(p, expand_ratio):
  """Fold inference-mode BatchNorm into conv weights + bias vectors."""
  f = {}
  if expand_ratio != 1:
    inv1 = p["g1"] / jnp.sqrt(p["v1"] + EPS)
    f["w1_eff"] = p["w1"][:, :, 0, 0] * inv1[:, None]              # (Chid, Cin)
    f["b1"] = (p["be1"] - p["m1"] * inv1)[:, None]                 # (Chid, 1)
  inv2 = p["g2"] / jnp.sqrt(p["v2"] + EPS)
  f["wdw_eff"] = p["wdw"][:, 0, :, :] * inv2[:, None, None]        # (Chid,3,3)
  f["b2"] = (p["be2"] - p["m2"] * inv2)[:, None]                   # (Chid, 1)
  inv3 = p["g3"] / jnp.sqrt(p["v3"] + EPS)
  f["w2_eff"] = p["w2"][:, :, 0, 0] * inv3[:, None]                # (Cout,Chid)
  f["b3"] = (p["be3"] - p["m3"] * inv3)[:, None]                   # (Cout, 1)
  return f


def build_dw_weight_masks(wdw_eff, H, W):
  """(9, Chid, H*W) table: depthwise weight * halo-validity mask per tap."""
  ii = jnp.arange(H)[:, None]
  jj = jnp.arange(W)[None, :]
  taps = []
  for di in range(3):
    for dj in range(3):
      valid = ((ii + di - 1 >= 0) & (ii + di - 1 < H) &
               (jj + dj - 1 >= 0) & (jj + dj - 1 < W)).astype(jnp.float32)
      taps.append(wdw_eff[:, di, dj][:, None] * valid.reshape(1, H * W))
  return jnp.stack(taps, axis=0)                                   # (9,Chid,HW)


def build_subsample_matrix(H, W, stride):
  """(H*W, Ho*Wo) 0/1 matrix selecting strided positions (stride-2 path)."""
  Ho = (H - 1) // stride + 1
  Wo = (W - 1) // stride + 1
  f = jnp.arange(H * W)
  fo = jnp.arange(Ho * Wo)
  sel = ((f[:, None] // W == stride * (fo[None, :] // Wo)) &
         (f[:, None] % W == stride * (fo[None, :] % Wo)))
  return sel.astype(jnp.float32), Ho, Wo


# ----------------------------------------------------------------------------
# Full InvertedResidual forward (single fused pallas_call)
# ----------------------------------------------------------------------------
def inverted_residual_forward(x, params, *, stride, expand_ratio):
  N, Cin, H, W = x.shape
  chid = round(Cin * expand_ratio)
  cout = params["w2"].shape[0]
  identity = (stride == 1) and (Cin == cout)
  expand = expand_ratio != 1
  HW = H * W

  folded = fold_params(params, expand_ratio)
  wm = build_dw_weight_masks(folded["wdw_eff"], H, W)
  if stride != 1:
    S, Ho, Wo = build_subsample_matrix(H, W, stride)
  else:
    S, Ho, Wo = None, H, W
  HoWo = Ho * Wo

  kernel = _make_fused_kernel(chid=chid, h=H, w=W, stride=stride,
                              expand=expand, identity=identity)

  x_flat = x.astype(jnp.float32).reshape(N, Cin, HW)     # lane-dense input

  in_specs = [pl.BlockSpec((None, Cin, HW), lambda n: (n, 0, 0))]
  args = [x_flat]
  if expand:
    in_specs += [pl.BlockSpec((chid, Cin), lambda n: (0, 0)),
                 pl.BlockSpec((chid, 1), lambda n: (0, 0))]
    args += [folded["w1_eff"], folded["b1"]]
  in_specs += [pl.BlockSpec((9, chid, HW), lambda n: (0, 0, 0)),
               pl.BlockSpec((chid, 1), lambda n: (0, 0))]
  args += [wm, folded["b2"]]
  if stride != 1:
    in_specs += [pl.BlockSpec((HW, HoWo), lambda n: (0, 0))]
    args += [S]
  in_specs += [pl.BlockSpec((cout, chid), lambda n: (0, 0)),
               pl.BlockSpec((cout, 1), lambda n: (0, 0))]
  args += [folded["w2_eff"], folded["b3"]]

  out = pl.pallas_call(
      kernel,
      out_shape=jax.ShapeDtypeStruct((N, cout, HoWo), jnp.float32),
      grid=(N,),
      in_specs=in_specs,
      out_specs=pl.BlockSpec((None, cout, HoWo), lambda n: (n, 0, 0)),
      compiler_params=pltpu.CompilerParams(dimension_semantics=("parallel",)),
  )(*args)
  return out.reshape(N, cout, Ho, Wo)


# ----------------------------------------------------------------------------
# Deterministic parameter construction
# ----------------------------------------------------------------------------
def init_params(key, cin, cout, expand_ratio):
  chid = round(cin * expand_ratio)
  ks = jax.random.split(key, 15)
  p = {}
  if expand_ratio != 1:
    p["w1"] = 0.3 * jax.random.normal(ks[0], (chid, cin, 1, 1), jnp.float32)
    p["g1"] = 1.0 + 0.1 * jax.random.normal(ks[1], (chid,), jnp.float32)
    p["be1"] = 0.1 * jax.random.normal(ks[2], (chid,), jnp.float32)
    p["m1"] = 0.1 * jax.random.normal(ks[3], (chid,), jnp.float32)
    p["v1"] = 0.5 + jnp.abs(jax.random.normal(ks[4], (chid,), jnp.float32))
  p["wdw"] = 0.3 * jax.random.normal(ks[5], (chid, 1, 3, 3), jnp.float32)
  p["g2"] = 1.0 + 0.1 * jax.random.normal(ks[6], (chid,), jnp.float32)
  p["be2"] = 0.1 * jax.random.normal(ks[7], (chid,), jnp.float32)
  p["m2"] = 0.1 * jax.random.normal(ks[8], (chid,), jnp.float32)
  p["v2"] = 0.5 + jnp.abs(jax.random.normal(ks[9], (chid,), jnp.float32))
  p["w2"] = 0.3 * jax.random.normal(ks[10], (cout, chid, 1, 1), jnp.float32)
  p["g3"] = 1.0 + 0.1 * jax.random.normal(ks[11], (cout,), jnp.float32)
  p["be3"] = 0.1 * jax.random.normal(ks[12], (cout,), jnp.float32)
  p["m3"] = 0.1 * jax.random.normal(ks[13], (cout,), jnp.float32)
  p["v3"] = 0.5 + jnp.abs(jax.random.normal(ks[14], (cout,), jnp.float32))
  return p


# ----------------------------------------------------------------------------
# Pure-JAX reference (mirrors the PyTorch module, NCHW, inference-mode BN)
# ----------------------------------------------------------------------------
def ref_forward(x, p, stride, expand_ratio, identity):
  P = lax.Precision.HIGHEST

  def bn(y, g, b, m, v):
    inv = g / jnp.sqrt(v + EPS)
    return y * inv[None, :, None, None] + (b - m * inv)[None, :, None, None]

  h = x
  if expand_ratio != 1:
    h = lax.conv_general_dilated(h, p["w1"], (1, 1), "VALID",
                                 dimension_numbers=("NCHW", "OIHW", "NCHW"),
                                 precision=P)
    h = jnp.clip(bn(h, p["g1"], p["be1"], p["m1"], p["v1"]), 0.0, 6.0)
  h = lax.conv_general_dilated(h, p["wdw"], (stride, stride), ((1, 1), (1, 1)),
                               dimension_numbers=("NCHW", "OIHW", "NCHW"),
                               feature_group_count=p["wdw"].shape[0],
                               precision=P)
  h = jnp.clip(bn(h, p["g2"], p["be2"], p["m2"], p["v2"]), 0.0, 6.0)
  h = lax.conv_general_dilated(h, p["w2"], (1, 1), "VALID",
                               dimension_numbers=("NCHW", "OIHW", "NCHW"),
                               precision=P)
  h = bn(h, p["g3"], p["be3"], p["m3"], p["v3"])
  return x + h if identity else h


# ----------------------------------------------------------------------------
if __name__ == "__main__":
  key = jax.random.PRNGKey(0)

  #  (N, Cin, H,  W,  Cout, stride, expand_ratio)
  configs = [
      (2, 4, 16, 16, 4, 1, 2),   # residual (identity) path
      (2, 4, 16, 16, 4, 2, 2),   # stride-2 (selection-matmul subsample)
      (2, 8, 16, 16, 8, 1, 1),   # expand_ratio == 1 (no expand conv)
  ]

  for (N, Cin, H, W, Cout, stride, er) in configs:
    key, kx, kp = jax.random.split(key, 3)
    x = jax.random.normal(kx, (N, Cin, H, W), jnp.float32)
    raw = init_params(kp, Cin, Cout, er)
    identity = (stride == 1) and (Cin == Cout)

    out = inverted_residual_forward(x, raw, stride=stride, expand_ratio=er)
    out = jax.block_until_ready(out)

    ref = ref_forward(x, raw, stride, er, identity)
    assert out.shape == ref.shape, (out.shape, ref.shape)
    assert jnp.allclose(out, ref, rtol=1e-3, atol=1e-3), float(
        jnp.max(jnp.abs(out - ref)))

  print("KERNEL_OK")
</pallas_src>

<mosaic_0001>
module attributes {stable_mosaic.version = 11 : i64} {
  func.func @kernel(%arg0: i32, %arg1: memref<1x4x256xf32, #tpu.memory_space<vmem>>, %arg2: memref<8x4xf32, #tpu.memory_space<vmem>>, %arg3: memref<8x1xf32, #tpu.memory_space<vmem>>, %arg4: memref<9x8x256xf32, #tpu.memory_space<vmem>>, %arg5: memref<8x1xf32, #tpu.memory_space<vmem>>, %arg6: memref<4x8xf32, #tpu.memory_space<vmem>>, %arg7: memref<4x1xf32, #tpu.memory_space<vmem>>, %arg8: memref<1x4x256xf32, #tpu.memory_space<vmem>>) attributes {dimension_semantics = [#tpu.dimension_semantics<parallel>], iteration_bounds = array<i64: 2>, scalar_prefetch = 0 : i64, scratch_operands = 0 : i64, tpu.core_type = #tpu.core_type<tc>, window_params = [{transform_indices = @transform_0, window_bounds = array<i64: 1, 4, 256>}, {pipeline_mode = #tpu.pipeline_mode<synchronous>, transform_indices = @transform_1, window_bounds = array<i64: 8, 4>}, {pipeline_mode = #tpu.pipeline_mode<synchronous>, transform_indices = @transform_2, window_bounds = array<i64: 8, 1>}, {pipeline_mode = #tpu.pipeline_mode<synchronous>, transform_indices = @transform_3, window_bounds = array<i64: 9, 8, 256>}, {pipeline_mode = #tpu.pipeline_mode<synchronous>, transform_indices = @transform_4, window_bounds = array<i64: 8, 1>}, {pipeline_mode = #tpu.pipeline_mode<synchronous>, transform_indices = @transform_5, window_bounds = array<i64: 4, 8>}, {pipeline_mode = #tpu.pipeline_mode<synchronous>, transform_indices = @transform_6, window_bounds = array<i64: 4, 1>}, {transform_indices = @transform_7, window_bounds = array<i64: 1, 4, 256>}]} {
    %c0 = arith.constant 0 : index
    %c0_0 = arith.constant 0 : index
    %c0_1 = arith.constant 0 : index
    %0 = vector.load %arg1[%c0, %c0_0, %c0_1] : memref<1x4x256xf32, #tpu.memory_space<vmem>>, vector<1x4x256xf32>
    %1 = vector.shape_cast %0 : vector<1x4x256xf32> to vector<4x256xf32>
    %c0_2 = arith.constant 0 : index
    %c0_3 = arith.constant 0 : index
    %2 = vector.load %arg2[%c0_2, %c0_3] : memref<8x4xf32, #tpu.memory_space<vmem>>, vector<8x4xf32>
    %cst = arith.constant dense<0.000000e+00> : vector<8x256xf32>
    %3 = tpu.matmul %2, %1, %cst {dimension_numbers = #tpu.dot_dimension_numbers<[1], [0], [0], [1], [0, 0, 1, 1], [], []>} : vector<8x4xf32>, vector<4x256xf32>, vector<8x256xf32> -> vector<8x256xf32>
    %c0_4 = arith.constant 0 : index
    %c0_5 = arith.constant 0 : index
    %4 = vector.load %arg3[%c0_4, %c0_5] : memref<8x1xf32, #tpu.memory_space<vmem>>, vector<8x1xf32>
    %5 = vector.broadcast %4 : vector<8x1xf32> to vector<8x256xf32>
    %6 = arith.addf %3, %5 : vector<8x256xf32>
    %cst_6 = arith.constant 0.000000e+00 : f32
    %cst_7 = arith.constant 6.000000e+00 : f32
    %7 = vector.broadcast %cst_6 : f32 to vector<8x256xf32>
    %8 = arith.maximumf %7, %6 : vector<8x256xf32>
    %9 = vector.broadcast %cst_7 : f32 to vector<8x256xf32>
    %10 = arith.minimumf %9, %8 : vector<8x256xf32>
    %c4 = arith.constant 4 : index
    %c0_8 = arith.constant 0 : index
    %c0_9 = arith.constant 0 : index
    %11 = vector.load %arg4[%c4, %c0_8, %c0_9] : memref<9x8x256xf32, #tpu.memory_space<vmem>>, vector<1x8x256xf32>
    %12 = vector.shape_cast %11 : vector<1x8x256xf32> to vector<8x256xf32>
    %13 = arith.mulf %12, %10 : vector<8x256xf32>
    %c17_i32 = arith.constant 17 : i32
    %14 = tpu.dynamic_rotate %10 by %c17_i32 dim 1 : vector<8x256xf32>, i32 -> vector<8x256xf32>
    %c0_10 = arith.constant 0 : index
    %c0_11 = arith.constant 0 : index
    %c0_12 = arith.constant 0 : index
    %15 = vector.load %arg4[%c0_10, %c0_11, %c0_12] : memref<9x8x256xf32, #tpu.memory_space<vmem>>, vector<1x8x256xf32>
    %16 = vector.shape_cast %15 : vector<1x8x256xf32> to vector<8x256xf32>
    %17 = arith.mulf %16, %14 : vector<8x256xf32>
    %18 = arith.addf %13, %17 : vector<8x256xf32>
    %c16_i32 = arith.constant 16 : i32
    %19 = tpu.dynamic_rotate %10 by %c16_i32 dim 1 : vector<8x256xf32>, i32 -> vector<8x256xf32>
    %c1 = arith.constant 1 : index
    %c0_13 = arith.constant 0 : index
    %c0_14 = arith.constant 0 : index
    %20 = vector.load %arg4[%c1, %c0_13, %c0_14] : memref<9x8x256xf32, #tpu.memory_space<vmem>>, vector<1x8x256xf32>
    %21 = vector.shape_cast %20 : vector<1x8x256xf32> to vector<8x256xf32>
    %22 = arith.mulf %21, %19 : vector<8x256xf32>
    %23 = arith.addf %18, %22 : vector<8x256xf32>
    %c15_i32 = arith.constant 15 : i32
    %24 = tpu.dynamic_rotate %10 by %c15_i32 dim 1 : vector<8x256xf32>, i32 -> vector<8x256xf32>
    %c2 = arith.constant 2 : index
    %c0_15 = arith.constant 0 : index
    %c0_16 = arith.constant 0 : index
    %25 = vector.load %arg4[%c2, %c0_15, %c0_16] : memref<9x8x256xf32, #tpu.memory_space<vmem>>, vector<1x8x256xf32>
    %26 = vector.shape_cast %25 : vector<1x8x256xf32> to vector<8x256xf32>
    %27 = arith.mulf %26, %24 : vector<8x256xf32>
    %28 = arith.addf %23, %27 : vector<8x256xf32>
    %c1_i32 = arith.constant 1 : i32
    %29 = tpu.dynamic_rotate %10 by %c1_i32 dim 1 : vector<8x256xf32>, i32 -> vector<8x256xf32>
    %c3 = arith.constant 3 : index
    %c0_17 = arith.constant 0 : index
    %c0_18 = arith.constant 0 : index
    %30 = vector.load %arg4[%c3, %c0_17, %c0_18] : memref<9x8x256xf32, #tpu.memory_space<vmem>>, vector<1x8x256xf32>
    %31 = vector.shape_cast %30 : vector<1x8x256xf32> to vector<8x256xf32>
    %32 = arith.mulf %31, %29 : vector<8x256xf32>
    %33 = arith.addf %28, %32 : vector<8x256xf32>
    %c255_i32 = arith.constant 255 : i32
    %34 = tpu.dynamic_rotate %10 by %c255_i32 dim 1 : vector<8x256xf32>, i32 -> vector<8x256xf32>
    %c5 = arith.constant 5 : index
    %c0_19 = arith.constant 0 : index
    %c0_20 = arith.constant 0 : index
    %35 = vector.load %arg4[%c5, %c0_19, %c0_20] : memref<9x8x256xf32, #tpu.memory_space<vmem>>, vector<1x8x256xf32>
    %36 = vector.shape_cast %35 : vector<1x8x256xf32> to vector<8x256xf32>
    %37 = arith.mulf %36, %34 : vector<8x256xf32>
    %38 = arith.addf %33, %37 : vector<8x256xf32>
    %c241_i32 = arith.constant 241 : i32
    %39 = tpu.dynamic_rotate %10 by %c241_i32 dim 1 : vector<8x256xf32>, i32 -> vector<8x256xf32>
    %c6 = arith.constant 6 : index
    %c0_21 = arith.constant 0 : index
    %c0_22 = arith.constant 0 : index
    %40 = vector.load %arg4[%c6, %c0_21, %c0_22] : memref<9x8x256xf32, #tpu.memory_space<vmem>>, vector<1x8x256xf32>
    %41 = vector.shape_cast %40 : vector<1x8x256xf32> to vector<8x256xf32>
    %42 = arith.mulf %41, %39 : vector<8x256xf32>
    %43 = arith.addf %38, %42 : vector<8x256xf32>
    %c240_i32 = arith.constant 240 : i32
    %44 = tpu.dynamic_rotate %10 by %c240_i32 dim 1 : vector<8x256xf32>, i32 -> vector<8x256xf32>
    %c7 = arith.constant 7 : index
    %c0_23 = arith.constant 0 : index
    %c0_24 = arith.constant 0 : index
    %45 = vector.load %arg4[%c7, %c0_23, %c0_24] : memref<9x8x256xf32, #tpu.memory_space<vmem>>, vector<1x8x256xf32>
    %46 = vector.shape_cast %45 : vector<1x8x256xf32> to vector<8x256xf32>
    %47 = arith.mulf %46, %44 : vector<8x256xf32>
    %48 = arith.addf %43, %47 : vector<8x256xf32>
    %c239_i32 = arith.constant 239 : i32
    %49 = tpu.dynamic_rotate %10 by %c239_i32 dim 1 : vector<8x256xf32>, i32 -> vector<8x256xf32>
    %c8 = arith.constant 8 : index
    %c0_25 = arith.constant 0 : index
    %c0_26 = arith.constant 0 : index
    %50 = vector.load %arg4[%c8, %c0_25, %c0_26] : memref<9x8x256xf32, #tpu.memory_space<vmem>>, vector<1x8x256xf32>
    %51 = vector.shape_cast %50 : vector<1x8x256xf32> to vector<8x256xf32>
    %52 = arith.mulf %51, %49 : vector<8x256xf32>
    %53 = arith.addf %48, %52 : vector<8x256xf32>
    %c0_27 = arith.constant 0 : index
    %c0_28 = arith.constant 0 : index
    %54 = vector.load %arg5[%c0_27, %c0_28] : memref<8x1xf32, #tpu.memory_space<vmem>>, vector<8x1xf32>
    %55 = vector.broadcast %54 : vector<8x1xf32> to vector<8x256xf32>
    %56 = arith.addf %53, %55 : vector<8x256xf32>
    %cst_29 = arith.constant 0.000000e+00 : f32
    %cst_30 = arith.constant 6.000000e+00 : f32
    %57 = vector.broadcast %cst_29 : f32 to vector<8x256xf32>
    %58 = arith.maximumf %57, %56 : vector<8x256xf32>
    %59 = vector.broadcast %cst_30 : f32 to vector<8x256xf32>
    %60 = arith.minimumf %59, %58 : vector<8x256xf32>
    %c0_31 = arith.constant 0 : index
    %c0_32 = arith.constant 0 : index
    %61 = vector.load %arg6[%c0_31, %c0_32] : memref<4x8xf32, #tpu.memory_space<vmem>>, vector<4x8xf32>
    %cst_33 = arith.constant dense<0.000000e+00> : vector<4x256xf32>
    %62 = tpu.matmul %61, %60, %cst_33 {dimension_numbers = #tpu.dot_dimension_numbers<[1], [0], [0], [1], [0, 0, 1, 1], [], []>} : vector<4x8xf32>, vector<8x256xf32>, vector<4x256xf32> -> vector<4x256xf32>
    %c0_34 = arith.constant 0 : index
    %c0_35 = arith.constant 0 : index
    %63 = vector.load %arg7[%c0_34, %c0_35] : memref<4x1xf32, #tpu.memory_space<vmem>>, vector<4x1xf32>
    %64 = vector.broadcast %63 : vector<4x1xf32> to vector<4x256xf32>
    %65 = arith.addf %62, %64 : vector<4x256xf32>
    %66 = arith.addf %65, %1 : vector<4x256xf32>
    %c0_36 = arith.constant 0 : index
    %c0_37 = arith.constant 0 : index
    %c0_38 = arith.constant 0 : index
    %67 = vector.load %arg8[%c0_36, %c0_37, %c0_38] : memref<1x4x256xf32, #tpu.memory_space<vmem>>, vector<1x4x256xf32>
    %68 = vector.shape_cast %67 : vector<1x4x256xf32> to vector<4x256xf32>
    %69 = vector.shape_cast %66 : vector<4x256xf32> to vector<1x4x256xf32>
    tpu.vector_store %arg8[%c0_36, %c0_37, %c0_38], %69 {strides = array<i32>} : memref<1x4x256xf32, #tpu.memory_space<vmem>>, vector<1x4x256xf32>,
    return
  }
  func.func @transform_0(%arg0: i32) -> (i32, i32, i32) {
    %c0_i32 = arith.constant 0 : i32
    %c0_i32_0 = arith.constant 0 : i32
    %c0_i32_1 = arith.constant 0 : i32
    return %arg0, %c0_i32, %c0_i32_0 : i32, i32, i32
  }
  func.func @transform_1(%arg0: i32) -> (i32, i32) {
    %c0_i32 = arith.constant 0 : i32
    %c0_i32_0 = arith.constant 0 : i32
    %c0_i32_1 = arith.constant 0 : i32
    return %c0_i32, %c0_i32_0 : i32, i32
  }
  func.func @transform_2(%arg0: i32) -> (i32, i32) {
    %c0_i32 = arith.constant 0 : i32
    %c0_i32_0 = arith.constant 0 : i32
    %c0_i32_1 = arith.constant 0 : i32
    return %c0_i32, %c0_i32_0 : i32, i32
  }
  func.func @transform_3(%arg0: i32) -> (i32, i32, i32) {
    %c0_i32 = arith.constant 0 : i32
    %c0_i32_0 = arith.constant 0 : i32
    %c0_i32_1 = arith.constant 0 : i32
    %c0_i32_2 = arith.constant 0 : i32
    return %c0_i32, %c0_i32_0, %c0_i32_1 : i32, i32, i32
  }
  func.func @transform_4(%arg0: i32) -> (i32, i32) {
    %c0_i32 = arith.constant 0 : i32
    %c0_i32_0 = arith.constant 0 : i32
    %c0_i32_1 = arith.constant 0 : i32
    return %c0_i32, %c0_i32_0 : i32, i32
  }
  func.func @transform_5(%arg0: i32) -> (i32, i32) {
    %c0_i32 = arith.constant 0 : i32
    %c0_i32_0 = arith.constant 0 : i32
    %c0_i32_1 = arith.constant 0 : i32
    return %c0_i32, %c0_i32_0 : i32, i32
  }
  func.func @transform_6(%arg0: i32) -> (i32, i32) {
    %c0_i32 = arith.constant 0 : i32
    %c0_i32_0 = arith.constant 0 : i32
    %c0_i32_1 = arith.constant 0 : i32
    return %c0_i32, %c0_i32_0 : i32, i32
  }
  func.func @transform_7(%arg0: i32) -> (i32, i32, i32) {
    %c0_i32 = arith.constant 0 : i32
    %c0_i32_0 = arith.constant 0 : i32
    %c0_i32_1 = arith.constant 0 : i32
    return %arg0, %c0_i32, %c0_i32_0 : i32, i32, i32
  }
}

</mosaic_0001>

<llo_original>
// kernel: tpu_custom_call.1
$region0: #{tpu_custom_call.1}
  #allocation0 [shape = 'u32[]', space=smem, size = 0x4, offset = 0x4, fixed_abs, tag = 'smem constant byte address 0x4 - core index']
  #allocation1 [shape = 'u32[144,128]{1,0:T(1,128)}', space=vmem, size = 0x12000, scoped, tag = 'internal scratch']
  %s0 = inlined_call_operand.vmem [shape: f32[2,4,256], index: 0, kind: input, shape index: {}]
  %s1 = inlined_call_operand.vmem [shape: f32[8,4], index: 1, kind: input, shape index: {}]
  %s2 = inlined_call_operand.vmem [shape: f32[8,1], index: 2, kind: input, shape index: {}]
  %s3 = inlined_call_operand.hbm [shape: f32[9,8,256], index: 3, kind: input, shape index: {}]
  %s4 = inlined_call_operand.vmem [shape: f32[8,1], index: 4, kind: input, shape index: {}]
  %s5 = inlined_call_operand.vmem [shape: f32[4,8], index: 5, kind: input, shape index: {}]
  %s6 = inlined_call_operand.vmem [shape: f32[4,1], index: 6, kind: input, shape index: {}]
  %s7 = inlined_call_operand.hbm [shape: f32[2,4,256], index: 7, kind: output, shape index: {}]
  %s8 = sld [smem:[#allocation0]]
  $region65: #{tpu_custom_call.1} parent=0
    _
  %s10 = ssub.s32 1, %s8
  %s11 = scalar_select 0, %s10, %s8
  $region1: #{tpu_custom_call.1} parent=0
    #allocation2 [shape = 'u8[73728]{0}', space=vmem, size = 0x12000, scoped, tag = 'input window, operand 3, single buffered']
    #allocation3 [shape = 's32[2]{0}', space=sflag, size = 0x8, scoped, tag = 'scoped memory for tpu_custom_call.1']
    #allocation4 [shape = 's32[2]{0}', space=sflag, size = 0x8, scoped, tag = 'scoped memory for tpu_custom_call.1']
    #allocation5 [shape = 'u8[8192]{0}', space=vmem, size = 0x2000, scoped, tag = 'output window, operand 0']
    %12 = vsyncpa [#allocation3], 0
    %13 = vsyncpa [#allocation4], 0
    %s14 = scalar_lea.sflag [#allocation4], 1
    %15 = vsyncpa %s14, 0
    loop: start=0, step=1, limit=4
    $region2: #{tpu_custom_call.1} parent=1 // loop_pre_header
      _
    $region3: #{tpu_custom_call.1} parent=1 // loop_header
      %s17 = sphi 0, %s21
      %p18 = scmp.ge.s32.totalorder %s17, 4
      %s27 = sphi 0, %s29
      %s30 = sphi 0, %s27
      %s31 = sphi 0, %s30
      %s47 = sphi 0, %s31
      %s51 = sphi 0, %s51
      %s53 = sphi 0, %s51
      %s54 = sphi 0, %s53
      %s68 = sphi 0, %s54
      %s72 = sphi 0, %s72
      %s74 = sphi 0, %s72
      %s75 = sphi 0, %s74
      %s89 = sphi 0, %s75
      %s93 = sphi 0, %s93
      %s95 = sphi 0, %s93
      %s96 = sphi 0, %s95
      %s110 = sphi 0, %s96
      %s114 = sphi 0, %s114
      %s116 = sphi 0, %s114
      %s117 = sphi 0, %s116
      %s131 = sphi 0, %s117
      %s135 = sphi 0, %s135
      %s137 = sphi 0, %s135
      %s138 = sphi 0, %s137
      %s152 = sphi 0, %s138
      %s156 = sphi 0, %s156
      %s158 = sphi 0, %s156
      %s159 = sphi 0, %s158
      %s173 = sphi 0, %s159
      %s179 = sphi 0, %s181
      %s182 = sphi 0, %s179
      %s183 = sphi 0, %s182
      %s199 = sphi 0, %s183
    $region4: #{tpu_custom_call.1} parent=1 // loop_header_branch
      %20 = sbr.rel (%p18) target = $region8
    $region5: #{tpu_custom_call.1} parent=1 // loop_body
      %s22 = ssub.s32 %s17, 1
      %s23 = ssub.s32 %s17, 2
      %s24 = sadd.s32 %s17, 1
      %s25 = ssub.s32 %s17, %s24
      %p26 = scmp.eq.s32.totalorder %s25, 0
      %s28 = sadd.s32 %s27, 1
      %s29 = scalar_select %p26, %s27, %s28
      %p32 = pneg %p26
      %p33 = scmp.eq.s32.totalorder %s17, 1
      %p34 = por %p32, %p33
      %p35 = scmp.ne.s32.totalorder %s27, %s30
      %p36 = scmp.eq.s32.totalorder %s17, 0
      %p37 = por %p35, %p36
      %p38 = scmp.ne.s32.totalorder %s27, %s30
      %p39 = scmp.eq.s32.totalorder %s22, 1
      %p40 = por %p38, %p39
      %p41 = scmp.ne.s32.totalorder %s30, %s31
      %p42 = scmp.eq.s32.totalorder %s22, 0
      %p43 = por %p41, %p42
      %p44 = scmp.ne.s32.totalorder %s30, %s31
      %p45 = scmp.eq.s32.totalorder %s23, 1
      %p46 = por %p44, %p45
      %p48 = scmp.ne.s32.totalorder %s31, %s47
      %p49 = scmp.eq.s32.totalorder %s23, 0
      %p50 = por %p48, %p49
      %s52 = sadd.s32 %s51, 1
      %p55 = scmp.eq.s32.totalorder %s17, 1
      %p56 = scmp.ne.s32.totalorder %s51, %s53
      %p57 = scmp.eq.s32.totalorder %s17, 0
      %p58 = por %p56, %p57
      %p59 = scmp.ne.s32.totalorder %s51, %s53
      %p60 = scmp.eq.s32.totalorder %s22, 1
      %p61 = por %p59, %p60
      %p62 = scmp.ne.s32.totalorder %s53, %s54
      %p63 = scmp.eq.s32.totalorder %s22, 0
      %p64 = por %p62, %p63
      %p65 = scmp.ne.s32.totalorder %s53, %s54
      %p66 = scmp.eq.s32.totalorder %s23, 1
      %p67 = por %p65, %p66
      %p69 = scmp.ne.s32.totalorder %s54, %s68
      %p70 = scmp.eq.s32.totalorder %s23, 0
      %p71 = por %p69, %p70
      %s73 = sadd.s32 %s72, 1
      %p76 = scmp.eq.s32.totalorder %s17, 1
      %p77 = scmp.ne.s32.totalorder %s72, %s74
      %p78 = scmp.eq.s32.totalorder %s17, 0
      %p79 = por %p77, %p78
      %p80 = scmp.ne.s32.totalorder %s72, %s74
      %p81 = scmp.eq.s32.totalorder %s22, 1
      %p82 = por %p80, %p81
      %p83 = scmp.ne.s32.totalorder %s74, %s75
      %p84 = scmp.eq.s32.totalorder %s22, 0
      %p85 = por %p83, %p84
      %p86 = scmp.ne.s32.totalorder %s74, %s75
      %p87 = scmp.eq.s32.totalorder %s23, 1
      %p88 = por %p86, %p87
      %p90 = scmp.ne.s32.totalorder %s75, %s89
      %p91 = scmp.eq.s32.totalorder %s23, 0
      %p92 = por %p90, %p91
      %s94 = sadd.s32 %s93, 1
      %p97 = scmp.eq.s32.totalorder %s17, 1
      %p98 = scmp.ne.s32.totalorder %s93, %s95
      %p99 = scmp.eq.s32.totalorder %s17, 0
      %p100 = por %p98, %p99
      %p101 = scmp.ne.s32.totalorder %s93, %s95
      %p102 = scmp.eq.s32.totalorder %s22, 1
      %p103 = por %p101, %p102
      %p104 = scmp.ne.s32.totalorder %s95, %s96
      %p105 = scmp.eq.s32.totalorder %s22, 0
      %p106 = por %p104, %p105
      %p107 = scmp.ne.s32.totalorder %s95, %s96
      %p108 = scmp.eq.s32.totalorder %s23, 1
      %p109 = por %p107, %p108
      %p111 = scmp.ne.s32.totalorder %s96, %s110
      %p112 = scmp.eq.s32.totalorder %s23, 0
      %p113 = por %p111, %p112
      %s115 = sadd.s32 %s114, 1
      %p118 = scmp.eq.s32.totalorder %s17, 1
      %p119 = scmp.ne.s32.totalorder %s114, %s116
      %p120 = scmp.eq.s32.totalorder %s17, 0
      %p121 = por %p119, %p120
      %p122 = scmp.ne.s32.totalorder %s114, %s116
      %p123 = scmp.eq.s32.totalorder %s22, 1
      %p124 = por %p122, %p123
      %p125 = scmp.ne.s32.totalorder %s116, %s117
      %p126 = scmp.eq.s32.totalorder %s22, 0
      %p127 = por %p125, %p126
      %p128 = scmp.ne.s32.totalorder %s116, %s117
      %p129 = scmp.eq.s32.totalorder %s23, 1
      %p130 = por %p128, %p129
      %p132 = scmp.ne.s32.totalorder %s117, %s131
      %p133 = scmp.eq.s32.totalorder %s23, 0
      %p134 = por %p132, %p133
      %s136 = sadd.s32 %s135, 1
      %p139 = scmp.eq.s32.totalorder %s17, 1
      %p140 = scmp.ne.s32.totalorder %s135, %s137
      %p141 = scmp.eq.s32.totalorder %s17, 0
      %p142 = por %p140, %p141
      %p143 = scmp.ne.s32.totalorder %s135, %s137
      %p144 = scmp.eq.s32.totalorder %s22, 1
      %p145 = por %p143, %p144
      %p146 = scmp.ne.s32.totalorder %s137, %s138
      %p147 = scmp.eq.s32.totalorder %s22, 0
      %p148 = por %p146, %p147
      %p149 = scmp.ne.s32.totalorder %s137, %s138
      %p150 = scmp.eq.s32.totalorder %s23, 1
      %p151 = por %p149, %p150
      %p153 = scmp.ne.s32.totalorder %s138, %s152
      %p154 = scmp.eq.s32.totalorder %s23, 0
      %p155 = por %p153, %p154
      %s157 = sadd.s32 %s156, 1
      %p160 = scmp.eq.s32.totalorder %s17, 1
      %p161 = scmp.ne.s32.totalorder %s156, %s158
      %p162 = scmp.eq.s32.totalorder %s17, 0
      %p163 = por %p161, %p162
      %p164 = scmp.ne.s32.totalorder %s156, %s158
      %p165 = scmp.eq.s32.totalorder %s22, 1
      %p166 = por %p164, %p165
      %p167 = scmp.ne.s32.totalorder %s158, %s159
      %p168 = scmp.eq.s32.totalorder %s22, 0
      %p169 = por %p167, %p168
      %p170 = scmp.ne.s32.totalorder %s158, %s159
      %p171 = scmp.eq.s32.totalorder %s23, 1
      %p172 = por %p170, %p171
      %p174 = scmp.ne.s32.totalorder %s159, %s173
      %p175 = scmp.eq.s32.totalorder %s23, 0
      %p176 = por %p174, %p175
      %s177 = ssub.s32 %s17, %s24
      %p178 = scmp.eq.s32.totalorder %s177, 0
      %s180 = sadd.s32 %s179, 1
      %s181 = scalar_select %p178, %s179, %s180
      %p184 = pneg %p178
      %p185 = scmp.eq.s32.totalorder %s17, 1
      %p186 = por %p184, %p185
      %p187 = scmp.ne.s32.totalorder %s179, %s182
      %p188 = scmp.eq.s32.totalorder %s17, 0
      %p189 = por %p187, %p188
      %p190 = scmp.ne.s32.totalorder %s179, %s182
      %p191 = scmp.eq.s32.totalorder %s22, 1
      %p192 = por %p190, %p191
      %p193 = scmp.ne.s32.totalorder %s182, %s183
      %p194 = scmp.eq.s32.totalorder %s22, 0
      %p195 = por %p193, %p194
      %p196 = scmp.ne.s32.totalorder %s182, %s183
      %p197 = scmp.eq.s32.totalorder %s23, 1
      %p198 = por %p196, %p197
      %p200 = scmp.ne.s32.totalorder %s183, %s199
      %p201 = scmp.eq.s32.totalorder %s23, 0
      %p202 = por %p200, %p201
      %p203 = scmp.le.s32.totalorder 1, %s17
      %p204 = scmp.lt.s32.totalorder %s17, 3
      %p205 = pnand %p203, %p204
      %p206 = pneg %p205
      // Predicated region
      $region9: #{tpu_custom_call.1} parent=5 // pred_check
        _
      $region10: #{tpu_custom_call.1} parent=5 // pred_check_branch
        %208 = sbr.rel (%p205) target = $region12
      $region11: #{tpu_custom_call.1} parent=5 // pred_region
        %s209 = ssub.s32 %s17, 1
        // Predicated region
        $region13: #{tpu_custom_call.1} parent=11 // pred_check
          %p210 = pneg %p64
        $region14: #{tpu_custom_call.1} parent=11 // pred_check_branch
          %212 = sbr.rel (%p210) target = $region16
        $region15: #{tpu_custom_call.1} parent=11 // pred_region
          _
        $region16: #{tpu_custom_call.1} parent=11 // pred_fallthru
          _
        // Predicated region
        $region17: #{tpu_custom_call.1} parent=11 // pred_check
          %p213 = pneg %p85
        $region18: #{tpu_custom_call.1} parent=11 // pred_check_branch
          %215 = sbr.rel (%p213) target = $region20
        $region19: #{tpu_custom_call.1} parent=11 // pred_region
          _
        $region20: #{tpu_custom_call.1} parent=11 // pred_fallthru
          _
        // Predicated region
        $region21: #{tpu_custom_call.1} parent=11 // pred_check
          %p216 = pneg %p106
        $region22: #{tpu_custom_call.1} parent=11 // pred_check_branch
          %218 = sbr.rel (%p216) target = $region24
        $region23: #{tpu_custom_call.1} parent=11 // pred_region
          %s220 = ssub.s32 2304, 2304
          %221 = vsyncadd [#allocation3], %s220
          %s222 = sshll.u32 [#allocation2], 4
          %s223 = int_to_ptr.vmem [resolvable:$true] %s222
          %228 = dma.hbm_to_vmem [thread:$0]  %s3, 2304, %s223, [#allocation3], 256, 256, 16
        $region24: #{tpu_custom_call.1} parent=11 // pred_fallthru
          _
        // Predicated region
        $region25: #{tpu_custom_call.1} parent=11 // pred_check
          %p229 = pneg %p127
        $region26: #{tpu_custom_call.1} parent=11 // pred_check_branch
          %231 = sbr.rel (%p229) target = $region28
        $region27: #{tpu_custom_call.1} parent=11 // pred_region
          _
        $region28: #{tpu_custom_call.1} parent=11 // pred_fallthru
          _
        // Predicated region
        $region29: #{tpu_custom_call.1} parent=11 // pred_check
          %p232 = pneg %p148
        $region30: #{tpu_custom_call.1} parent=11 // pred_check_branch
          %234 = sbr.rel (%p232) target = $region32
        $region31: #{tpu_custom_call.1} parent=11 // pred_region
          _
        $region32: #{tpu_custom_call.1} parent=11 // pred_fallthru
          _
        // Predicated region
        $region33: #{tpu_custom_call.1} parent=11 // pred_check
          %p235 = pneg %p169
        $region34: #{tpu_custom_call.1} parent=11 // pred_check_branch
          %237 = sbr.rel (%p235) target = $region36
        $region35: #{tpu_custom_call.1} parent=11 // pred_region
          _
        $region36: #{tpu_custom_call.1} parent=11 // pred_fallthru
          _
      $region12: #{tpu_custom_call.1} parent=5 // pred_fallthru
        _
      %p238 = scmp.lt.s32.totalorder %s17, 2
      // Predicated region
      $region37: #{tpu_custom_call.1} parent=5 // pred_check
        %p239 = pneg %p238
      $region38: #{tpu_custom_call.1} parent=5 // pred_check_branch
        %241 = sbr.rel (%p239) target = $region40
      $region39: #{tpu_custom_call.1} parent=5 // pred_region
        // Predicated region
        $region41: #{tpu_custom_call.1} parent=39 // pred_check
          %p242 = pneg %p37
        $region42: #{tpu_custom_call.1} parent=39 // pred_check_branch
          %244 = sbr.rel (%p242) target = $region44
        $region43: #{tpu_custom_call.1} parent=39 // pred_region
          %p245 = scmp.lt.s32.totalorder %s17, 1
          %s246 = scalar_select %p245, %s17, 1
          %s247 = smul.addr %s246, 2
          %s248 = smul.addr %s247, 4
          %s249 = scalar_lea.vmem %s0, %s248
        $region44: #{tpu_custom_call.1} parent=39 // pred_fallthru
          _
      $region40: #{tpu_custom_call.1} parent=5 // pred_fallthru
        _
      %p250 = scmp.le.s32.totalorder 1, %s17
      %p251 = scmp.lt.s32.totalorder %s17, 3
      %p252 = pnand %p250, %p251
      %p253 = pneg %p252
      // Predicated region
      $region45: #{tpu_custom_call.1} parent=5 // pred_check
        _
      $region46: #{tpu_custom_call.1} parent=5 // pred_check_branch
        %255 = sbr.rel (%p252) target = $region48
      $region47: #{tpu_custom_call.1} parent=5 // pred_region
        %s256 = ssub.s32 %s17, 1
        // Predicated region
        $region49: #{tpu_custom_call.1} parent=47 // pred_check
          %p257 = pneg %p106
        $region50: #{tpu_custom_call.1} parent=47 // pred_check_branch
          %259 = sbr.rel (%p257) target = $region52
        $region51: #{tpu_custom_call.1} parent=47 // pred_region
          %260 = dma.done [#allocation3], 2304
        $region52: #{tpu_custom_call.1} parent=47 // pred_fallthru
          _
        %p261 = scmp.lt.s32.totalorder %s22, 1
        %s262 = scalar_select %p261, %s22, 1
        %s263 = smul.addr %s262, 2
        %s264 = smul.addr %s263, 4
        %s265 = scalar_lea.vmem %s0, %s264
        %p266 = pneg %p43
        %p267 = pneg %p40
        %p268 = pneg %p64
        %p269 = pneg %p61
        %p270 = pneg %p85
        %p271 = pneg %p82
        %p272 = pneg %p106
        %p273 = pneg %p103
        %p274 = pneg %p127
        %p275 = pneg %p124
        %p276 = pneg %p148
        %p277 = pneg %p145
        %p278 = pneg %p169
        %p279 = pneg %p166
        %p280 = pneg %p195
        %p281 = pneg %p192
        %s282 = sand.u32 %s182, 1
        %s283 = scalar_lea.sflag [#allocation4], %s282
        %s284 = sand.u32 %s182, 1
        %s285 = smul.addr %s284, 8
        %s286 = scalar_lea.vmem [#allocation5], %s285
        %p287 = scmp.lt.s32.totalorder %s22, 1
        %s288 = scalar_select %p287, %s22, 1
        %s289 = smul.addr %s288, 2
        %s290 = smul.addr %s289, 4
        %s291 = scalar_lea.vmem %s0, %s290
        %v292 = vld [vmem:[%s291] sm:$0xff]
        %v293 = vld [vmem:[%s1] sm:$0xff]
        %v294 = vld [vmem:[%s2] sm:$0xff]
        %296 = vset.pattern.permute.xlu0 0
        %297 = vperm.xlu0 %296, %v294
        %v298 = vpop.permute.xlu0 %297
        %v301 = vcombine.high %v292, %v292
        %vm302 = vcmask 31744
        %v304 = vsel %vm302, %v293, 0
        %vm306 = vcmask 1043456
        %v307 = vsel %vm306, %v292, 0
        %v309 = vsel %vm306, %v301, 0
        %311 = vmatprep.subr.mxu0 %v309
        %312 = vmatpush1.msra.mxu0 %v307
        %313 = vmatprep.subr.mxu0 0.0
        %314 = vmatpush1.msra.mxu0 0.0
        %315 = vmatprep.subr.mxu0 0.0
        %316 = vmatpush1.msra.mxu0 0.0
        %317 = vmatprep.subr.mxu0 0.0
        %318 = vmatpush1.msra.mxu0 0.0
        %319 = vmatprep.subr.mxu0 0.0
        %320 = vmatpush1.msra.mxu0 0.0
        %321 = vmatprep.subr.mxu0 0.0
        %322 = vmatpush1.msra.mxu0 0.0
        %323 = vmatprep.subr.mxu0 0.0
        %324 = vmatpush1.msra.mxu0 0.0
        %325 = vmatprep.subr.mxu0 0.0
        %326 = vmatpush1.msra.mxu0 0.0
        %327 = vmatprep.subr.mxu0 0.0
        %328 = vmatpush1.msra.mxu0 0.0
        %329 = vmatprep.subr.mxu0 0.0
        %330 = vmatpush1.msra.mxu0 0.0
        %331 = vmatprep.subr.mxu0 0.0
        %332 = vmatpush1.msra.mxu0 0.0
        %333 = vmatprep.subr.mxu0 0.0
        %334 = vmatpush1.msra.mxu0 0.0
        %335 = vmatprep.subr.mxu0 0.0
        %336 = vmatpush1.msra.mxu0 0.0
        %337 = vmatprep.subr.mxu0 0.0
        %338 = vmatpush1.msra.mxu0 0.0
        %339 = vmatprep.subr.mxu0 0.0
        %340 = vmatpush1.msra.mxu0 0.0
        %341 = vmatprep.subr.mxu0 0.0
        %342 = vmatpush1.msra.mxu0 0.0
        %343 = vmatprep.subr.mxu0 0.0
        %344 = vmatpush1.msra.mxu0 0.0
        %345 = vmatprep.subr.mxu0 0.0
        %346 = vmatpush1.msra.mxu0 0.0
        %347 = vmatprep.subr.mxu0 0.0
        %348 = vmatpush1.msra.mxu0 0.0
        %349 = vmatprep.subr.mxu0 0.0
        %350 = vmatpush1.msra.mxu0 0.0
        %351 = vmatprep.subr.mxu0 0.0
        %352 = vmatpush1.msra.mxu0 0.0
        %353 = vmatprep.subr.mxu0 0.0
        %354 = vmatpush1.msra.mxu0 0.0
        %355 = vmatprep.subr.mxu0 0.0
        %356 = vmatpush1.msra.mxu0 0.0
        %357 = vmatprep.subr.mxu0 0.0
        %358 = vmatpush1.msra.mxu0 0.0
        %359 = vmatprep.subr.mxu0 0.0
        %360 = vmatpush1.msra.mxu0 0.0
        %361 = vmatprep.subr.mxu0 0.0
        %362 = vmatpush1.msra.mxu0 0.0
        %363 = vmatprep.subr.mxu0 0.0
        %364 = vmatpush1.msra.mxu0 0.0
        %365 = vmatprep.subr.mxu0 0.0
        %366 = vmatpush1.msra.mxu0 0.0
        %367 = vmatprep.subr.mxu0 0.0
        %368 = vmatpush1.msra.mxu0 0.0
        %369 = vmatprep.subr.mxu0 0.0
        %370 = vmatpush1.msra.mxu0 0.0
        %371 = vmatprep.subr.mxu0 0.0
        %372 = vmatpush1.msra.mxu0 0.0
        %373 = vmatprep.subr.mxu0 0.0
        %374 = vmatpush1.msra.mxu0 0.0
        %375 = vmatprep.mubr.f32.mxu0 0.0
        %376 = vmatmul.mubr.f32.gmra.mrb[0].mxu0 %v304
        %v377 = vpop.f32.mrb[0].mxu0
        %v378 = vadd.f32 %v298, %v377
        %v379 = vpop.f32.mrb[0].mxu0
        %v380 = vadd.f32 %v298, %v379
        %381 = vdwg.mxu0
        %v382 = vmax.f32 %v378, 0.0
        %v383 = vmax.f32 %v380, 0.0
        %v384 = vmin.f32 %v382, 6.0
        %v385 = vmin.f32 %v383, 6.0
        %s386 = scalar_lea.vmem [#allocation2], 64
        %v387 = vld [vmem:[%s386] sm:$0xff]
        %v388 = vld [vmem:[%s386 + $0x8] sm:$0xff]
        %v389 = vmul.f32 %v387, %v384
        %v390 = vmul.f32 %v388, %v385
        %391 = vrot.lane.b32.xlu0 %v384, 17
        %v392 = vpop.permute.xlu0 %391
        %393 = vrot.lane.b32.xlu0 %v385, 17
        %v394 = vpop.permute.xlu0 %393
        %v395 = vlaneseq
        %v396 = vand.u32 %v395, 127
        %vm397 = vcmp.lt.s32.totalorder %v396, 17
        %v398 = vsel %vm397, %v392, %v394
        %v399 = vsel %vm397, %v394, %v392
        %v400 = vld [vmem:[#allocation2] sm:$0xff]
        %v401 = vld [vmem:[#allocation2 + $0x8] sm:$0xff]
        %v402 = vmul.f32 %v400, %v399
        %v403 = vmul.f32 %v401, %v398
        %v404 = vadd.f32 %v389, %v402
        %v405 = vadd.f32 %v390, %v403
        %406 = vrot.lane.b32.xlu0 %v384, 16
        %v407 = vpop.permute.xlu0 %406
        %408 = vrot.lane.b32.xlu0 %v385, 16
        %v409 = vpop.permute.xlu0 %408
        %vm410 = vcmp.lt.s32.totalorder %v396, 16
        %v411 = vsel %vm410, %v407, %v409
        %v412 = vsel %vm410, %v409, %v407
        %s413 = scalar_lea.vmem [#allocation2], 16
        %v414 = vld [vmem:[%s413] sm:$0xff]
        %v415 = vld [vmem:[%s413 + $0x8] sm:$0xff]
        %v416 = vmul.f32 %v414, %v412
        %v417 = vmul.f32 %v415, %v411
        %v418 = vadd.f32 %v404, %v416
        %v419 = vadd.f32 %v405, %v417
        %420 = vrot.lane.b32.xlu0 %v384, 15
        %v421 = vpop.permute.xlu0 %420
        %422 = vrot.lane.b32.xlu0 %v385, 15
        %v423 = vpop.permute.xlu0 %422
        %vm424 = vcmp.lt.s32.totalorder %v396, 15
        %v425 = vsel %vm424, %v421, %v423
        %v426 = vsel %vm424, %v423, %v421
        %s427 = scalar_lea.vmem [#allocation2], 32
        %v428 = vld [vmem:[%s427] sm:$0xff]
        %v429 = vld [vmem:[%s427 + $0x8] sm:$0xff]
        %v430 = vmul.f32 %v428, %v426
        %v431 = vmul.f32 %v429, %v425
        %v432 = vadd.f32 %v418, %v430
        %v433 = vadd.f32 %v419, %v431
        %434 = vrot.lane.b32.xlu0 %v384, 1
        %v435 = vpop.permute.xlu0 %434
        %436 = vrot.lane.b32.xlu0 %v385, 1
        %v437 = vpop.permute.xlu0 %436
        %vm438 = vcmp.lt.s32.totalorder %v396, 1
        %v439 = vsel %vm438, %v435, %v437
        %v440 = vsel %vm438, %v437, %v435
        %s441 = scalar_lea.vmem [#allocation2], 48
        %v442 = vld [vmem:[%s441] sm:$0xff]
        %v443 = vld [vmem:[%s441 + $0x8] sm:$0xff]
        %v444 = vmul.f32 %v442, %v440
        %v445 = vmul.f32 %v443, %v439
        %v446 = vadd.f32 %v432, %v444
        %v447 = vadd.f32 %v433, %v445
        %448 = vrot.lane.b32.xlu0 %v384, 127
        %v449 = vpop.permute.xlu0 %448
        %450 = vrot.lane.b32.xlu0 %v385, 127
        %v451 = vpop.permute.xlu0 %450
        %vm452 = vcmp.lt.s32.totalorder %v396, 127
        %v453 = vsel %vm452, %v449, %v451
        %v454 = vsel %vm452, %v451, %v449
        %s455 = scalar_lea.vmem [#allocation2], 80
        %v456 = vld [vmem:[%s455] sm:$0xff]
        %v457 = vld [vmem:[%s455 + $0x8] sm:$0xff]
        %v458 = vmul.f32 %v456, %v453
        %v459 = vmul.f32 %v457, %v454
        %v460 = vadd.f32 %v446, %v458
        %v461 = vadd.f32 %v447, %v459
        %462 = vrot.lane.b32.xlu0 %v384, 113
        %v463 = vpop.permute.xlu0 %462
        %464 = vrot.lane.b32.xlu0 %v385, 113
        %v465 = vpop.permute.xlu0 %464
        %vm466 = vcmp.lt.s32.totalorder %v396, 113
        %v467 = vsel %vm466, %v463, %v465
        %v468 = vsel %vm466, %v465, %v463
        %s469 = scalar_lea.vmem [#allocation2], 96
        %v470 = vld [vmem:[%s469] sm:$0xff]
        %v471 = vld [vmem:[%s469 + $0x8] sm:$0xff]
        %v472 = vmul.f32 %v470, %v467
        %v473 = vmul.f32 %v471, %v468
        %v474 = vadd.f32 %v460, %v472
        %v475 = vadd.f32 %v461, %v473
        %476 = vrot.lane.b32.xlu0 %v384, 112
        %v477 = vpop.permute.xlu0 %476
        %478 = vrot.lane.b32.xlu0 %v385, 112
        %v479 = vpop.permute.xlu0 %478
        %vm480 = vcmp.lt.s32.totalorder %v396, 112
        %v481 = vsel %vm480, %v477, %v479
        %v482 = vsel %vm480, %v479, %v477
        %s483 = scalar_lea.vmem [#allocation2], 112
        %v484 = vld [vmem:[%s483] sm:$0xff]
        %v485 = vld [vmem:[%s483 + $0x8] sm:$0xff]
        %v486 = vmul.f32 %v484, %v481
        %v487 = vmul.f32 %v485, %v482
        %v488 = vadd.f32 %v474, %v486
        %v489 = vadd.f32 %v475, %v487
        %490 = vrot.lane.b32.xlu0 %v384, 111
        %v491 = vpop.permute.xlu0 %490
        %492 = vrot.lane.b32.xlu0 %v385, 111
        %v493 = vpop.permute.xlu0 %492
        %vm494 = vcmp.lt.s32.totalorder %v396, 111
        %v495 = vsel %vm494, %v491, %v493
        %v496 = vsel %vm494, %v493, %v491
        %s497 = scalar_lea.vmem [#allocation2], 128
        %v498 = vld [vmem:[%s497] sm:$0xff]
        %v499 = vld [vmem:[%s497 + $0x8] sm:$0xff]
        %v500 = vmul.f32 %v498, %v495
        %v501 = vmul.f32 %v499, %v496
        %v502 = vadd.f32 %v488, %v500
        %v503 = vadd.f32 %v489, %v501
        %v504 = vld [vmem:[%s4] sm:$0xff]
        %506 = vset.pattern.permute.xlu0 0
        %507 = vperm.xlu0 %506, %v504
        %v508 = vpop.permute.xlu0 %507
        %v510 = vadd.f32 %v502, %v508
        %v511 = vadd.f32 %v503, %v508
        %v512 = vmax.f32 %v510, 0.0
        %v513 = vmax.f32 %v511, 0.0
        %v514 = vmin.f32 %v512, 6.0
        %v515 = vmin.f32 %v513, 6.0
        %v516 = vld [vmem:[%s5] sm:$0xf]
        %v517 = vld [vmem:[%s6] sm:$0xf]
        %519 = vset.pattern.permute.xlu0 0
        %520 = vperm.xlu0 %519, %v517
        %v521 = vpop.permute.xlu0 %520
        %vm523 = vcmask 64512
        %v525 = vsel %vm523, %v516, 0
        %527 = vmatprep.subr.mxu0 %v515
        %528 = vmatpush1.msra.mxu0 %v514
        %529 = vmatprep.subr.mxu0 0.0
        %530 = vmatpush1.msra.mxu0 0.0
        %531 = vmatprep.subr.mxu0 0.0
        %532 = vmatpush1.msra.mxu0 0.0
        %533 = vmatprep.subr.mxu0 0.0
        %534 = vmatpush1.msra.mxu0 0.0
        %535 = vmatprep.subr.mxu0 0.0
        %536 = vmatpush1.msra.mxu0 0.0
        %537 = vmatprep.subr.mxu0 0.0
        %538 = vmatpush1.msra.mxu0 0.0
        %539 = vmatprep.subr.mxu0 0.0
        %540 = vmatpush1.msra.mxu0 0.0
        %541 = vmatprep.subr.mxu0 0.0
        %542 = vmatpush1.msra.mxu0 0.0
        %543 = vmatprep.subr.mxu0 0.0
        %544 = vmatpush1.msra.mxu0 0.0
        %545 = vmatprep.subr.mxu0 0.0
        %546 = vmatpush1.msra.mxu0 0.0
        %547 = vmatprep.subr.mxu0 0.0
        %548 = vmatpush1.msra.mxu0 0.0
        %549 = vmatprep.subr.mxu0 0.0
        %550 = vmatpush1.msra.mxu0 0.0
        %551 = vmatprep.subr.mxu0 0.0
        %552 = vmatpush1.msra.mxu0 0.0
        %553 = vmatprep.subr.mxu0 0.0
        %554 = vmatpush1.msra.mxu0 0.0
        %555 = vmatprep.subr.mxu0 0.0
        %556 = vmatpush1.msra.mxu0 0.0
        %557 = vmatprep.subr.mxu0 0.0
        %558 = vmatpush1.msra.mxu0 0.0
        %559 = vmatprep.subr.mxu0 0.0
        %560 = vmatpush1.msra.mxu0 0.0
        %561 = vmatprep.subr.mxu0 0.0
        %562 = vmatpush1.msra.mxu0 0.0
        %563 = vmatprep.subr.mxu0 0.0
        %564 = vmatpush1.msra.mxu0 0.0
        %565 = vmatprep.subr.mxu0 0.0
        %566 = vmatpush1.msra.mxu0 0.0
        %567 = vmatprep.subr.mxu0 0.0
        %568 = vmatpush1.msra.mxu0 0.0
        %569 = vmatprep.subr.mxu0 0.0
        %570 = vmatpush1.msra.mxu0 0.0
        %571 = vmatprep.subr.mxu0 0.0
        %572 = vmatpush1.msra.mxu0 0.0
        %573 = vmatprep.subr.mxu0 0.0
        %574 = vmatpush1.msra.mxu0 0.0
        %575 = vmatprep.subr.mxu0 0.0
        %576 = vmatpush1.msra.mxu0 0.0
        %577 = vmatprep.subr.mxu0 0.0
        %578 = vmatpush1.msra.mxu0 0.0
        %579 = vmatprep.subr.mxu0 0.0
        %580 = vmatpush1.msra.mxu0 0.0
        %581 = vmatprep.subr.mxu0 0.0
        %582 = vmatpush1.msra.mxu0 0.0
        %583 = vmatprep.subr.mxu0 0.0
        %584 = vmatpush1.msra.mxu0 0.0
        %585 = vmatprep.subr.mxu0 0.0
        %586 = vmatpush1.msra.mxu0 0.0
        %587 = vmatprep.subr.mxu0 0.0
        %588 = vmatpush1.msra.mxu0 0.0
        %589 = vmatprep.subr.mxu0 0.0
        %590 = vmatpush1.msra.mxu0 0.0
        %591 = vmatprep.mubr.f32.mxu0 0.0
        %592 = vmatmul.mubr.f32.gmra.mrb[0].mxu0 %v525
        %v593 = vpop.f32.mrb[0].mxu0
        %v594 = vadd.f32 %v521, %v593
        %v595 = vpop.f32.mrb[0].mxu0
        %v596 = vadd.f32 %v521, %v595
        %597 = vdwg.mxu0
        %v599 = vadd.f32 %v594, %v292
        %v600 = vadd.f32 %v596, %v301
        %v603 = vcombine.low %v599, %v600
        %605 = vst [vmem:[%s286] sm:$0xff] %v603
        %s606 = sand.u32 %s182, 1
        %s607 = scalar_lea.sflag [#allocation4], %s606
        %s608 = sand.u32 %s182, 1
        %s609 = smul.addr %s608, 8
        %s610 = scalar_lea.vmem [#allocation5], %s609
        // Predicated region
        $region53: #{tpu_custom_call.1} parent=47 // pred_check
          %p611 = pneg %p192
        $region54: #{tpu_custom_call.1} parent=47 // pred_check_branch
          %613 = sbr.rel (%p611) target = $region56
        $region55: #{tpu_custom_call.1} parent=47 // pred_region
          %s615 = ssub.s32 128, 128
          %616 = vsyncadd %s607, %s615
          %s617 = smul.addr %s22, 2
          %s618 = smul.addr %s617, 64
          %s619 = scalar_lea.hbm %s7, %s618
          %s621 = sshll.u32 %s610, 4
          %s622 = int_to_ptr.vmem [resolvable:$true] %s621
          %624 = dma.vmem_to_hbm [thread:$0]  %s622, 128, %s619, %s607
        $region56: #{tpu_custom_call.1} parent=47 // pred_fallthru
          _
      $region48: #{tpu_custom_call.1} parent=5 // pred_fallthru
        _
      %p625 = scmp.le.s32.totalorder 2, %s17
      // Predicated region
      $region57: #{tpu_custom_call.1} parent=5 // pred_check
        %p626 = pneg %p625
      $region58: #{tpu_custom_call.1} parent=5 // pred_check_branch
        %628 = sbr.rel (%p626) target = $region60
      $region59: #{tpu_custom_call.1} parent=5 // pred_region
        %s629 = ssub.s32 %s17, 2
        // Predicated region
        $region61: #{tpu_custom_call.1} parent=59 // pred_check
          %p630 = pneg %p198
        $region62: #{tpu_custom_call.1} parent=59 // pred_check_branch
          %632 = sbr.rel (%p630) target = $region64
        $region63: #{tpu_custom_call.1} parent=59 // pred_region
          %s633 = sand.u32 %s183, 1
          %s634 = scalar_lea.sflag [#allocation4], %s633
          %s635 = sand.u32 %s183, 1
          %s636 = smul.addr %s635, 8
          %s637 = scalar_lea.vmem [#allocation5], %s636
          %638 = dma.done %s634, 128
        $region64: #{tpu_custom_call.1} parent=59 // pred_fallthru
          _
      $region60: #{tpu_custom_call.1} parent=5 // pred_fallthru
        _
    $region6: #{tpu_custom_call.1} parent=1 // loop_footer
      %s21 = sadd.s32 1, %s17
    $region7: #{tpu_custom_call.1} parent=1 // loop_footer_branch
      %16 = sbr.rel target = $region3
    $region8: #{tpu_custom_call.1} parent=1 // loop_exit
      _
    %639 = vsyncpa [#allocation3], 1
    %s640 = scalar_lea.sflag [#allocation3], 1
    %641 = vsyncpa %s640, 1
    %642 = vsyncpa [#allocation4], 1
    %s643 = scalar_lea.sflag [#allocation4], 1
    %644 = vsyncpa %s643, 1

</llo_original>
